<compile_context>
chip_gen: v5e
topology: v5e:2x2
jax: 0.10.0
libtpu: 0.0.40
codegen_flags: <defaults>
</compile_context>

<pallas_src>
import functools
import numpy as np

import jax
import jax.numpy as jnp
from jax.experimental import pallas as pl
from jax.experimental.pallas import tpu as pltpu

EPS = 1e-6
_LANES = 128


# ----------------------------------------------------------------------------
# Generation-aware sizing (cores / VMEM capacity / target HBM block bytes).
# ----------------------------------------------------------------------------
def _detect_chip():
    kind = ""
    try:
        kind = (jax.devices()[0].device_kind or "").lower()
    except Exception:
        pass
    # Conservative default for unknown chips: smallest VMEM, single core,
    # no assumption of a strong f32 MXU.
    cfg = dict(kind=kind, cores=1, vmem_bytes=64 << 20,
               target_block_bytes=4 << 20, modern_mxu=False)
    if ("v7" in kind) or ("7x" in kind):
        cfg.update(cores=2, vmem_bytes=64 << 20,
                   target_block_bytes=4 << 20, modern_mxu=True)
    elif "v6" in kind:
        cfg.update(cores=1, vmem_bytes=128 << 20,
                   target_block_bytes=6 << 20, modern_mxu=True)
    elif ("v5 lite" in kind) or ("v5e" in kind) or ("v5lite" in kind):
        cfg.update(cores=1, vmem_bytes=128 << 20,
                   target_block_bytes=6 << 20, modern_mxu=False)
    elif ("v5p" in kind) or ("v5" in kind) or ("v4" in kind):
        cfg.update(cores=2, vmem_bytes=128 << 20,
                   target_block_bytes=6 << 20, modern_mxu=False)
    # Refine VMEM capacity from the runtime if available.
    try:
        info = pltpu.get_tpu_info()
        for name in ("vmem_capacity_bytes", "vmem_bytes", "vmem_size_bytes"):
            v = getattr(info, name, None)
            if v:
                cfg["vmem_bytes"] = int(v)
                break
    except Exception:
        pass
    return cfg


_CHIP = _detect_chip()


def _cdiv(a, b):
    return -(-a // b)


def _round_up(a, m):
    return _cdiv(a, m) * m


def _sublane_align(dtype):
    itemsize = jnp.dtype(dtype).itemsize
    if itemsize >= 4:
        return 8
    if itemsize == 2:
        return 16
    return 32


def _pick_tile(total, align, bytes_per_unit):
    """Largest `align`-multiple tile whose HBM footprint fits the per-chip
    target block size.  On chips with 2 TensorCores the step count is kept
    >= 2 and rounded to a multiple of the core count (balanced sharding); on
    single-core chips the grid is a serial loop, so no artificial split."""
    total, align = int(total), int(align)
    if total <= align:
        return total
    target = _CHIP["target_block_bytes"]
    tile = (target // max(int(bytes_per_unit), 1)) // align * align
    tile = max(align, min(tile, total))
    cores = _CHIP["cores"]
    if cores >= 2:
        steps = _cdiv(total, tile)
        steps = _round_up(max(steps, cores), cores)
        tile = min(total, _round_up(_cdiv(total, steps), align))
    return int(tile)


def _vmem_limit_bytes(block_elems, in_itemsize, out_itemsize):
    # Double-buffered I/O + f32 intermediates + slack.  Never clamp below the
    # computed need (under-provisioning degrades pipelining / fails compile).
    need = 2 * block_elems * (in_itemsize + out_itemsize)
    need += 4 * block_elems * 4
    need += 2 << 20
    lim = max(need, 32 << 20)
    cap = _CHIP["vmem_bytes"] - (4 << 20)
    return int(min(lim, max(cap, need)))


# ----------------------------------------------------------------------------
# channels_last, generic path: (TR, C) tile, reduce over lane axis C.
# ----------------------------------------------------------------------------
def _ln_last_kernel(x_ref, w_ref, b_ref, o_ref, *, eps):
    x = x_ref[...].astype(jnp.float32)                      # (TR, C)
    inv_c = 1.0 / x.shape[-1]
    mean = jnp.sum(x, axis=-1, keepdims=True) * inv_c
    xc = x - mean
    var = jnp.sum(xc * xc, axis=-1, keepdims=True) * inv_c  # two-pass, >= 0
    inv = jax.lax.rsqrt(var + eps)
    w = w_ref[...].astype(jnp.float32)                      # (1, C)
    b = b_ref[...].astype(jnp.float32)
    o_ref[...] = (xc * inv * w + b).astype(o_ref.dtype)


def _ln_last_plain(x, weight, bias, eps, orig_shape, R, C, donate_x):
    x2 = x.reshape(R, C)
    w2 = weight.astype(jnp.float32).reshape(1, C)
    b2 = bias.astype(jnp.float32).reshape(1, C)

    align = _sublane_align(x.dtype)
    TR = _pick_tile(R, align, C * x.dtype.itemsize)
    grid = (pl.cdiv(R, TR),)
    vmem_limit = _vmem_limit_bytes(TR * C, x.dtype.itemsize, x.dtype.itemsize)

    out = pl.pallas_call(
        functools.partial(_ln_last_kernel, eps=eps),
        out_shape=jax.ShapeDtypeStruct((R, C), x.dtype),
        grid=grid,
        in_specs=[
            pl.BlockSpec((TR, C), lambda i: (i, 0)),
            pl.BlockSpec((1, C), lambda i: (0, 0)),
            pl.BlockSpec((1, C), lambda i: (0, 0)),
        ],
        out_specs=pl.BlockSpec((TR, C), lambda i: (i, 0)),
        compiler_params=pltpu.CompilerParams(
            dimension_semantics=("parallel",),
            vmem_limit_bytes=vmem_limit),
        input_output_aliases={0: 0} if donate_x else {},
    )(x2, w2, b2)
    return out.reshape(orig_shape)


# ----------------------------------------------------------------------------
# channels_last, small-C lane-dense path: pack k = 128 // C logical rows into
# each 128-lane row; per-row stats via a block-diagonal segment-sum matmul
# (rides the otherwise idle MXU; loads/stores stay full 128-lane).
# ----------------------------------------------------------------------------
def _ln_last_packed_kernel(x_ref, seg_ref, w_ref, b_ref, o_ref, *, eps):
    x = x_ref[...].astype(jnp.float32)                      # (TR, 128)
    seg = seg_ref[...]                                      # (128, 128), == 1/c on same-segment lanes
    mean = jnp.dot(x, seg, preferred_element_type=jnp.float32,
                   precision=jax.lax.Precision.HIGHEST)
    xc = x - mean
    var = jnp.dot(xc * xc, seg, preferred_element_type=jnp.float32,
                  precision=jax.lax.Precision.HIGHEST)      # two-pass, >= 0
    inv = jax.lax.rsqrt(var + eps)
    w = w_ref[...].astype(jnp.float32)                      # (1, 128) = weight tiled k times
    b = b_ref[...].astype(jnp.float32)
    o_ref[...] = (xc * inv * w + b).astype(o_ref.dtype)


def _ln_last_packed(x, weight, bias, eps, orig_shape, R, C, k, donate_x):
    Rp = R // k
    G = k * C                                               # == 128
    xp = x.reshape(Rp, G)
    wp = jnp.tile(weight.astype(jnp.float32), (k,)).reshape(1, G)
    bp = jnp.tile(bias.astype(jnp.float32), (k,)).reshape(1, G)
    # Segment-mean matrix, built ONCE outside the kernel (hoisted per review);
    # its block index is constant so Pallas never re-fetches it.
    lane = np.arange(G)
    seg = (lane[:, None] // C == lane[None, :] // C).astype(np.float32) / float(C)
    seg = jnp.asarray(seg)

    align = _sublane_align(x.dtype)
    TR = _pick_tile(Rp, align, G * x.dtype.itemsize)
    grid = (pl.cdiv(Rp, TR),)
    vmem_limit = _vmem_limit_bytes(TR * G, x.dtype.itemsize, x.dtype.itemsize)

    out = pl.pallas_call(
        functools.partial(_ln_last_packed_kernel, eps=eps),
        out_shape=jax.ShapeDtypeStruct((Rp, G), x.dtype),
        grid=grid,
        in_specs=[
            pl.BlockSpec((TR, G), lambda i: (i, 0)),
            pl.BlockSpec((G, G), lambda i: (0, 0)),
            pl.BlockSpec((1, G), lambda i: (0, 0)),
            pl.BlockSpec((1, G), lambda i: (0, 0)),
        ],
        out_specs=pl.BlockSpec((TR, G), lambda i: (i, 0)),
        compiler_params=pltpu.CompilerParams(
            dimension_semantics=("parallel",),
            vmem_limit_bytes=vmem_limit),
        input_output_aliases={0: 0} if donate_x else {},
    )(xp, seg, wp, bp)
    return out.reshape(orig_shape)


def layer_norm_channels_last(x, weight, bias, eps=EPS, donate_x=False, packed=None):
    """x: (..., C), normalized over the last dim. Matches F.layer_norm."""
    orig_shape = x.shape
    C = int(orig_shape[-1])
    R = int(np.prod(orig_shape[:-1])) if len(orig_shape) > 1 else 1
    k = _LANES // C if (C < _LANES and _LANES % C == 0) else 0
    can_pack = bool(k) and R >= k and R % k == 0
    if packed is None:
        # The packed path spends ~128 MXU-FLOP per HBM byte (f32); keep it off
        # pre-v6 chips where the f32 MXU would flip the kernel MXU-bound.
        packed = can_pack and _CHIP["modern_mxu"]
    if packed and can_pack:
        return _ln_last_packed(x, weight, bias, eps, orig_shape, R, C, k, donate_x)
    return _ln_last_plain(x, weight, bias, eps, orig_shape, R, C, donate_x)


# ----------------------------------------------------------------------------
# channels_first: reduce over the channel (sublane-major) axis.
#   L >= 128 : (1, C, TL) blocks, spatial axis tiled.
#   L <  128 : (TN, C, L) blocks, several batch rows per step to amortize the
#              per-step overhead (blocks would otherwise be a few KB).
# ----------------------------------------------------------------------------
def _ln_first_kernel(x_ref, w_ref, b_ref, o_ref, *, eps):
    x = x_ref[...].astype(jnp.float32)                      # (TN, C, TL)
    inv_c = 1.0 / x.shape[1]
    mean = jnp.sum(x, axis=1, keepdims=True) * inv_c        # (TN, 1, TL)
    xc = x - mean
    var = jnp.sum(xc * xc, axis=1, keepdims=True) * inv_c   # two-pass, >= 0
    inv = jax.lax.rsqrt(var + eps)
    w = w_ref[...].astype(jnp.float32)                      # (1, C, 1)
    b = b_ref[...].astype(jnp.float32)
    o_ref[...] = (xc * inv * w + b).astype(o_ref.dtype)


def layer_norm_channels_first(x, weight, bias, eps=EPS, donate_x=False):
    """x: (N, C, *spatial), normalized over axis 1 (per-location over channels)."""
    N, C = int(x.shape[0]), int(x.shape[1])
    L = int(np.prod(x.shape[2:])) if x.ndim > 2 else 1
    x3 = x.reshape(N, C, L)
    w3 = weight.astype(jnp.float32).reshape(1, C, 1)
    b3 = bias.astype(jnp.float32).reshape(1, C, 1)
    itemsize = x.dtype.itemsize

    per_l_bytes = C * itemsize
    max_tl = (_CHIP["target_block_bytes"] // max(per_l_bytes, 1)) // _LANES * _LANES

    kern = functools.partial(_ln_first_kernel, eps=eps)

    if L <= _LANES or max_tl >= L:
        # Whole spatial extent per block; tile over batch rows instead.
        TN = _pick_tile(N, 1, C * L * itemsize)
        grid = (pl.cdiv(N, TN),)
        vmem_limit = _vmem_limit_bytes(TN * C * L, itemsize, itemsize)
        in_specs = [
            pl.BlockSpec((TN, C, L), lambda n: (n, 0, 0)),
            pl.BlockSpec((1, C, 1), lambda n: (0, 0, 0)),
            pl.BlockSpec((1, C, 1), lambda n: (0, 0, 0)),
        ]
        out_spec = pl.BlockSpec((TN, C, L), lambda n: (n, 0, 0))
        semantics = ("parallel",)
    else:
        TL = _pick_tile(L, _LANES, per_l_bytes)
        grid = (N, pl.cdiv(L, TL))
        vmem_limit = _vmem_limit_bytes(C * TL, itemsize, itemsize)
        in_specs = [
            pl.BlockSpec((1, C, TL), lambda n, l: (n, 0, l)),
            pl.BlockSpec((1, C, 1), lambda n, l: (0, 0, 0)),
            pl.BlockSpec((1, C, 1), lambda n, l: (0, 0, 0)),
        ]
        out_spec = pl.BlockSpec((1, C, TL), lambda n, l: (n, 0, l))
        semantics = ("parallel", "parallel")

    out = pl.pallas_call(
        kern,
        out_shape=jax.ShapeDtypeStruct((N, C, L), x.dtype),
        grid=grid,
        in_specs=in_specs,
        out_specs=out_spec,
        compiler_params=pltpu.CompilerParams(
            dimension_semantics=semantics,
            vmem_limit_bytes=vmem_limit),
        input_output_aliases={0: 0} if donate_x else {},
    )(x3, w3, b3)
    return out.reshape(x.shape)


# ----------------------------------------------------------------------------
# Pure-JAX references (mirror the PyTorch forward exactly).
# ----------------------------------------------------------------------------
def _ref_channels_last(x, w, b, eps=EPS):
    mean = jnp.mean(x, axis=-1, keepdims=True)
    var = jnp.mean((x - mean) ** 2, axis=-1, keepdims=True)
    return (x - mean) / jnp.sqrt(var + eps) * w + b


def _ref_channels_first(x, w, b, eps=EPS):
    u = jnp.mean(x, axis=1, keepdims=True)
    s = jnp.mean((x - u) ** 2, axis=1, keepdims=True)
    xn = (x - u) / jnp.sqrt(s + eps)
    bshape = (1, -1) + (1,) * (x.ndim - 2)
    return w.reshape(bshape) * xn + b.reshape(bshape)


if __name__ == "__main__":
    key = jax.random.PRNGKey(0)
    k1, k2, k3, k4, k5 = jax.random.split(key, 5)

    C = 32
    # Deterministic parameter init, exactly as in the module's __init__.
    weight = jnp.ones((C,), jnp.float32)
    bias = jnp.zeros((C,), jnp.float32)

    # channels_last, small C: auto dispatch AND forced lane-dense packed path.
    x_last = jax.random.normal(k1, (2, 4, 4, C), dtype=jnp.float32)
    ref_last = _ref_channels_last(x_last, weight, bias)
    y_auto = jax.block_until_ready(layer_norm_channels_last(x_last, weight, bias))
    np.testing.assert_allclose(np.asarray(y_auto), np.asarray(ref_last),
                               rtol=1e-5, atol=1e-5)
    y_packed = jax.block_until_ready(
        layer_norm_channels_last(x_last, weight, bias, packed=True))
    np.testing.assert_allclose(np.asarray(y_packed), np.asarray(ref_last),
                               rtol=1e-5, atol=1e-5)

    # channels_first, small spatial (L=32 < 128 -> batched (TN, C, L) blocks).
    x_first = jax.random.normal(k2, (2, C, 2, 4, 4), dtype=jnp.float32)
    y_first = jax.block_until_ready(layer_norm_channels_first(x_first, weight, bias))
    np.testing.assert_allclose(np.asarray(y_first),
                               np.asarray(_ref_channels_first(x_first, weight, bias)),
                               rtol=1e-5, atol=1e-5)

    # channels_last, generic path (C not a divisor of 128).
    C2 = 192
    w2 = jnp.ones((C2,), jnp.float32)
    b2 = jnp.zeros((C2,), jnp.float32)
    x_last2 = jax.random.normal(k3, (2, 64, C2), dtype=jnp.float32)
    y_last2 = jax.block_until_ready(layer_norm_channels_last(x_last2, w2, b2))
    np.testing.assert_allclose(np.asarray(y_last2),
                               np.asarray(_ref_channels_last(x_last2, w2, b2)),
                               rtol=1e-5, atol=1e-5)

    # channels_first with a larger spatial extent (L = 256 >= 128).
    x_first2 = jax.random.normal(k4, (2, C, 4, 8, 8), dtype=jnp.float32)
    y_first2 = jax.block_until_ready(layer_norm_channels_first(x_first2, weight, bias))
    np.testing.assert_allclose(np.asarray(y_first2),
                               np.asarray(_ref_channels_first(x_first2, weight, bias)),
                               rtol=1e-5, atol=1e-5)

    # channels_last with bf16 activations (dtype-aware tiling / sublane align).
    C3 = 256
    w3 = jnp.ones((C3,), jnp.float32)
    b3 = jnp.zeros((C3,), jnp.float32)
    x_bf16 = jax.random.normal(k5, (4, 64, C3), dtype=jnp.float32).astype(jnp.bfloat16)
    y_bf16 = jax.block_until_ready(layer_norm_channels_last(x_bf16, w3, b3))
    ref_bf16 = _ref_channels_last(x_bf16.astype(jnp.float32), w3, b3)
    np.testing.assert_allclose(np.asarray(y_bf16, dtype=np.float32),
                               np.asarray(ref_bf16),
                               rtol=2e-2, atol=5e-2)

    print("KERNEL_OK")
</pallas_src>

<mosaic_0001>
module attributes {stable_mosaic.version = 11 : i64} {
  func.func @_ln_last_kernel(%arg0: i32, %arg1: memref<32x32xf32, #tpu.memory_space<vmem>>, %arg2: memref<1x32xf32, #tpu.memory_space<vmem>>, %arg3: memref<1x32xf32, #tpu.memory_space<vmem>>, %arg4: memref<32x32xf32, #tpu.memory_space<vmem>>) attributes {dimension_semantics = [#tpu.dimension_semantics<parallel>], iteration_bounds = array<i64: 1>, scalar_prefetch = 0 : i64, scratch_operands = 0 : i64, tpu.core_type = #tpu.core_type<tc>, window_params = [{transform_indices = @transform_0, window_bounds = array<i64: 32, 32>}, {pipeline_mode = #tpu.pipeline_mode<synchronous>, transform_indices = @transform_1, window_bounds = array<i64: 1, 32>}, {pipeline_mode = #tpu.pipeline_mode<synchronous>, transform_indices = @transform_2, window_bounds = array<i64: 1, 32>}, {transform_indices = @transform_3, window_bounds = array<i64: 32, 32>}]} {
    %c0 = arith.constant 0 : index
    %c0_0 = arith.constant 0 : index
    %0 = vector.load %arg1[%c0, %c0_0] : memref<32x32xf32, #tpu.memory_space<vmem>>, vector<32x32xf32>
    %cst = arith.constant dense<0.000000e+00> : vector<32xf32>
    %1 = vector.multi_reduction <add>, %0, %cst [1] : vector<32x32xf32> to vector<32xf32>
    %2 = vector.shape_cast %1 : vector<32xf32> to vector<32x1xf32>
    %cst_1 = arith.constant 3.125000e-02 : f32
    %3 = vector.broadcast %cst_1 : f32 to vector<32x1xf32>
    %4 = arith.mulf %2, %3 : vector<32x1xf32>
    %5 = vector.broadcast %4 : vector<32x1xf32> to vector<32x32xf32>
    %6 = arith.subf %0, %5 : vector<32x32xf32>
    %7 = arith.mulf %6, %6 : vector<32x32xf32>
    %cst_2 = arith.constant dense<0.000000e+00> : vector<32xf32>
    %8 = vector.multi_reduction <add>, %7, %cst_2 [1] : vector<32x32xf32> to vector<32xf32>
    %9 = vector.shape_cast %8 : vector<32xf32> to vector<32x1xf32>
    %cst_3 = arith.constant 3.125000e-02 : f32
    %10 = vector.broadcast %cst_3 : f32 to vector<32x1xf32>
    %11 = arith.mulf %9, %10 : vector<32x1xf32>
    %cst_4 = arith.constant 9.99999997E-7 : f32
    %12 = vector.broadcast %cst_4 : f32 to vector<32x1xf32>
    %13 = arith.addf %11, %12 : vector<32x1xf32>
    %14 = math.rsqrt %13 : vector<32x1xf32>
    %c0_5 = arith.constant 0 : index
    %c0_6 = arith.constant 0 : index
    %15 = vector.load %arg2[%c0_5, %c0_6] : memref<1x32xf32, #tpu.memory_space<vmem>>, vector<1x32xf32>
    %c0_7 = arith.constant 0 : index
    %c0_8 = arith.constant 0 : index
    %16 = vector.load %arg3[%c0_7, %c0_8] : memref<1x32xf32, #tpu.memory_space<vmem>>, vector<1x32xf32>
    %17 = vector.broadcast %14 : vector<32x1xf32> to vector<32x32xf32>
    %18 = arith.mulf %6, %17 : vector<32x32xf32>
    %19 = vector.broadcast %15 : vector<1x32xf32> to vector<32x32xf32>
    %20 = arith.mulf %18, %19 : vector<32x32xf32>
    %21 = vector.broadcast %16 : vector<1x32xf32> to vector<32x32xf32>
    %22 = arith.addf %20, %21 : vector<32x32xf32>
    %c0_9 = arith.constant 0 : index
    %c0_10 = arith.constant 0 : index
    %23 = vector.load %arg4[%c0_9, %c0_10] : memref<32x32xf32, #tpu.memory_space<vmem>>, vector<32x32xf32>
    tpu.vector_store %arg4[%c0_9, %c0_10], %22 {strides = array<i32>} : memref<32x32xf32, #tpu.memory_space<vmem>>, vector<32x32xf32>,
    return
  }
  func.func @transform_0(%arg0: i32) -> (i32, i32) {
    %c0_i32 = arith.constant 0 : i32
    %c0_i32_0 = arith.constant 0 : i32
    return %arg0, %c0_i32 : i32, i32
  }
  func.func @transform_1(%arg0: i32) -> (i32, i32) {
    %c0_i32 = arith.constant 0 : i32
    %c0_i32_0 = arith.constant 0 : i32
    %c0_i32_1 = arith.constant 0 : i32
    return %c0_i32, %c0_i32_0 : i32, i32
  }
  func.func @transform_2(%arg0: i32) -> (i32, i32) {
    %c0_i32 = arith.constant 0 : i32
    %c0_i32_0 = arith.constant 0 : i32
    %c0_i32_1 = arith.constant 0 : i32
    return %c0_i32, %c0_i32_0 : i32, i32
  }
  func.func @transform_3(%arg0: i32) -> (i32, i32) {
    %c0_i32 = arith.constant 0 : i32
    %c0_i32_0 = arith.constant 0 : i32
    return %arg0, %c0_i32 : i32, i32
  }
}

</mosaic_0001>

<llo_original>
// kernel: tpu_custom_call.1
$region0: #{tpu_custom_call.1}
  #allocation0 [shape = 'u32[]', space=smem, size = 0x4, offset = 0x4, fixed_abs, tag = 'smem constant byte address 0x4 - core index']
  #allocation1 [shape = 'u32[72,128]{1,0:T(1,128)}', space=vmem, size = 0x9000, scoped, tag = 'internal scratch']
  %s0 = inlined_call_operand.hbm [shape: f32[32,32], index: 0, kind: input, shape index: {}]
  %s1 = inlined_call_operand.hbm [shape: f32[1,32], index: 1, kind: input, shape index: {}]
  %s2 = inlined_call_operand.vmem [shape: f32[1,32], index: 2, kind: input, shape index: {}]
  %s3 = inlined_call_operand.hbm [shape: f32[32,32], index: 3, kind: output, shape index: {}]
  %s4 = sld [smem:[#allocation0]]
  $region30: #{tpu_custom_call.1} parent=0
    _
  %s6 = ssub.s32 1, %s4
  %s7 = scalar_select 0, %s6, %s4
  $region1: #{tpu_custom_call.1} parent=0
    #allocation2 [shape = 'u8[16384]{0}', space=vmem, size = 0x4000, scoped, tag = 'input window, operand 0, single buffered']
    #allocation3 [shape = 's32[1]{0}', space=sflag, size = 0x4, scoped, tag = 'scoped memory for tpu_custom_call.1']
    #allocation4 [shape = 's32[1]{0}', space=sflag, size = 0x4, scoped, tag = 'scoped memory for tpu_custom_call.1']
    #allocation5 [shape = 'u8[512]{0}', space=vmem, size = 0x400, scoped, tag = 'input window, operand 1, single buffered']
    #allocation6 [shape = 's32[1]{0}', space=sflag, size = 0x4, scoped, tag = 'scoped memory for tpu_custom_call.1']
    #allocation7 [shape = 'u8[16384]{0}', space=vmem, size = 0x4000, scoped, tag = 'output window, operand 0, single buffered']
    %8 = vsyncpa [#allocation3], 0
    %9 = vsyncpa [#allocation6], 0
    %10 = vsyncpa [#allocation4], 0
    // Predicated region
    $region2: #{tpu_custom_call.1} parent=1 // pred_check
      _
    $region3: #{tpu_custom_call.1} parent=1 // pred_check_branch
      %12 = sbr.rel (0) target = $region5
    $region4: #{tpu_custom_call.1} parent=1 // pred_region
      %14 = vsyncadd [#allocation3], 0
      %s15 = sshll.u32 %s0, 4
      %s16 = int_to_ptr.hbm [resolvable:$true] %s15
      %s17 = sshll.u32 [#allocation2], 4
      %s18 = int_to_ptr.vmem [resolvable:$true] %s17
      %23 = dma.hbm_to_vmem [thread:$0]  %s16, 512, %s18, [#allocation3], 128, 128, 8
    $region5: #{tpu_custom_call.1} parent=1 // pred_fallthru
      _
    // Predicated region
    $region6: #{tpu_custom_call.1} parent=1 // pred_check
      _
    $region7: #{tpu_custom_call.1} parent=1 // pred_check_branch
      %25 = sbr.rel (0) target = $region9
    $region8: #{tpu_custom_call.1} parent=1 // pred_region
      %27 = vsyncadd [#allocation6], 0
      %s29 = sshll.u32 %s1, 4
      %s30 = int_to_ptr.hbm [resolvable:$true] %s29
      %s31 = sshll.u32 [#allocation5], 4
      %s32 = int_to_ptr.vmem [resolvable:$true] %s31
      %34 = dma.hbm_to_vmem [thread:$0]  %s30, 16, %s32, [#allocation6]
    $region9: #{tpu_custom_call.1} parent=1 // pred_fallthru
      _
    // Predicated region
    $region10: #{tpu_custom_call.1} parent=1 // pred_check
      _
    $region11: #{tpu_custom_call.1} parent=1 // pred_check_branch
      %36 = sbr.rel (0) target = $region13
    $region12: #{tpu_custom_call.1} parent=1 // pred_region
      _
    $region13: #{tpu_custom_call.1} parent=1 // pred_fallthru
      _
    // Predicated region
    $region14: #{tpu_custom_call.1} parent=1 // pred_check
      _
    $region15: #{tpu_custom_call.1} parent=1 // pred_check_branch
      %38 = sbr.rel (0) target = $region17
    $region16: #{tpu_custom_call.1} parent=1 // pred_region
      %40 = dma.done [#allocation3], 512
    $region17: #{tpu_custom_call.1} parent=1 // pred_fallthru
      _
    // Predicated region
    $region18: #{tpu_custom_call.1} parent=1 // pred_check
      _
    $region19: #{tpu_custom_call.1} parent=1 // pred_check_branch
      %42 = sbr.rel (0) target = $region21
    $region20: #{tpu_custom_call.1} parent=1 // pred_region
      %44 = dma.done [#allocation6], 16
    $region21: #{tpu_custom_call.1} parent=1 // pred_fallthru
      _
    %v45 = vld [vmem:[#allocation2] sm:$0xff]
    %v46 = vld [vmem:[#allocation2 + $0x8] sm:$0xff]
    %v47 = vld [vmem:[#allocation2 + $0x10] sm:$0xff]
    %v48 = vld [vmem:[#allocation2 + $0x18] sm:$0xff]
    %vm49 = vcmask 261120
    %v50 = vsel %vm49, %v45, 0.0
    %51 = vadd.xlane.f32.xlu0 %v50
    %v52 = vpop.xlane.xlu0 %51
    %v53 = vsel %vm49, %v46, 0.0
    %54 = vadd.xlane.f32.xlu0 %v53
    %v55 = vpop.xlane.xlu0 %54
    %v56 = vsel %vm49, %v47, 0.0
    %57 = vadd.xlane.f32.xlu0 %v56
    %v58 = vpop.xlane.xlu0 %57
    %v59 = vsel %vm49, %v48, 0.0
    %60 = vadd.xlane.f32.xlu0 %v59
    %v61 = vpop.xlane.xlu0 %60
    %v62 = vmul.f32 %v52, 0.03125
    %v63 = vmul.f32 %v55, 0.03125
    %v64 = vmul.f32 %v58, 0.03125
    %v65 = vmul.f32 %v61, 0.03125
    %v66 = vsub.f32 %v45, %v62
    %v67 = vsub.f32 %v46, %v63
    %v68 = vsub.f32 %v47, %v64
    %v69 = vsub.f32 %v48, %v65
    %v70 = vmul.f32 %v66, %v66
    %v71 = vmul.f32 %v67, %v67
    %v72 = vmul.f32 %v68, %v68
    %v73 = vmul.f32 %v69, %v69
    %v74 = vsel %vm49, %v70, 0.0
    %75 = vadd.xlane.f32.xlu0 %v74
    %v76 = vpop.xlane.xlu0 %75
    %v77 = vsel %vm49, %v71, 0.0
    %78 = vadd.xlane.f32.xlu0 %v77
    %v79 = vpop.xlane.xlu0 %78
    %v80 = vsel %vm49, %v72, 0.0
    %81 = vadd.xlane.f32.xlu0 %v80
    %v82 = vpop.xlane.xlu0 %81
    %v83 = vsel %vm49, %v73, 0.0
    %84 = vadd.xlane.f32.xlu0 %v83
    %v85 = vpop.xlane.xlu0 %84
    %v86 = vmul.f32 %v76, 0.03125
    %v87 = vmul.f32 %v79, 0.03125
    %v88 = vmul.f32 %v82, 0.03125
    %v89 = vmul.f32 %v85, 0.03125
    %v90 = vadd.f32 %v86, 1e-06
    %v91 = vadd.f32 %v87, 1e-06
    %v92 = vadd.f32 %v88, 1e-06
    %v93 = vadd.f32 %v89, 1e-06
    %v94 = vrsqrt.pop %v90
    %v95 = vmul.f32 %v94, %v90
    %v96 = vmul.f32 %v95, %v94
    %v97 = vmul.f32 0.5, %v96
    %v98 = vsub.f32 1.5, %v97
    %v99 = vmul.f32 %v94, %v98
    %vm100 = vweird.f32 %v90
    %vm101 = vweird.f32 %v94
    %vm102 = vmor %vm100, %vm101
    %v103 = vsel %vm102, %v94, %v99
    %v104 = vrsqrt.pop %v91
    %v105 = vmul.f32 %v104, %v91
    %v106 = vmul.f32 %v105, %v104
    %v107 = vmul.f32 0.5, %v106
    %v108 = vsub.f32 1.5, %v107
    %v109 = vmul.f32 %v104, %v108
    %vm110 = vweird.f32 %v91
    %vm111 = vweird.f32 %v104
    %vm112 = vmor %vm110, %vm111
    %v113 = vsel %vm112, %v104, %v109
    %v114 = vrsqrt.pop %v92
    %v115 = vmul.f32 %v114, %v92
    %v116 = vmul.f32 %v115, %v114
    %v117 = vmul.f32 0.5, %v116
    %v118 = vsub.f32 1.5, %v117
    %v119 = vmul.f32 %v114, %v118
    %vm120 = vweird.f32 %v92
    %vm121 = vweird.f32 %v114
    %vm122 = vmor %vm120, %vm121
    %v123 = vsel %vm122, %v114, %v119
    %v124 = vrsqrt.pop %v93
    %v125 = vmul.f32 %v124, %v93
    %v126 = vmul.f32 %v125, %v124
    %v127 = vmul.f32 0.5, %v126
    %v128 = vsub.f32 1.5, %v127
    %v129 = vmul.f32 %v124, %v128
    %vm130 = vweird.f32 %v93
    %vm131 = vweird.f32 %v124
    %vm132 = vmor %vm130, %vm131
    %v133 = vsel %vm132, %v124, %v129
    %v134 = vld [vmem:[#allocation5] sm:$0x1]
    %v135 = vld [vmem:[%s2] sm:$0x1]
    %v136 = vmul.f32 %v66, %v103
    %v137 = vmul.f32 %v67, %v113
    %v138 = vmul.f32 %v68, %v123
    %v139 = vmul.f32 %v69, %v133
    %v141 = vperm.slane %v134, 0
    %v143 = vmul.f32 %v136, %v141
    %v144 = vmul.f32 %v137, %v141
    %v145 = vmul.f32 %v138, %v141
    %v146 = vmul.f32 %v139, %v141
    %v148 = vperm.slane %v135, 0
    %v150 = vadd.f32 %v143, %v148
    %v151 = vadd.f32 %v144, %v148
    %v152 = vadd.f32 %v145, %v148
    %v153 = vadd.f32 %v146, %v148
    %154 = vst.msk [vmem:[#allocation7] sm:$0xff] %vm49, %v150
    %155 = vst.msk [vmem:[#allocation7 + $0x8] sm:$0xff] %vm49, %v151
    %156 = vst.msk [vmem:[#allocation7 + $0x10] sm:$0xff] %vm49, %v152
    %157 = vst.msk [vmem:[#allocation7 + $0x18] sm:$0xff] %vm49, %v153
    // Predicated region
    $region22: #{tpu_custom_call.1} parent=1 // pred_check
      _
    $region23: #{tpu_custom_call.1} parent=1 // pred_check_branch
      %159 = sbr.rel (0) target = $region25
    $region24: #{tpu_custom_call.1} parent=1 // pred_region
      %161 = vsyncadd [#allocation4], 0
      %s162 = sshll.u32 [#allocation7], 4
      %s163 = int_to_ptr.vmem [resolvable:$true] %s162
      %s164 = sshll.u32 %s3, 4
      %s165 = int_to_ptr.hbm [resolvable:$true] %s164
      %170 = dma.vmem_to_hbm [thread:$0]  %s163, 512, %s165, [#allocation4], 128, 128, 8
    $region25: #{tpu_custom_call.1} parent=1 // pred_fallthru
      _
    // Predicated region
    $region26: #{tpu_custom_call.1} parent=1 // pred_check
      _
    $region27: #{tpu_custom_call.1} parent=1 // pred_check_branch
      %172 = sbr.rel (0) target = $region29
    $region28: #{tpu_custom_call.1} parent=1 // pred_region
      %174 = dma.done [#allocation4], 512
    $region29: #{tpu_custom_call.1} parent=1 // pred_fallthru
      _
    %175 = vsyncpa [#allocation3], 1
    %176 = vsyncpa [#allocation6], 1
    %177 = vsyncpa [#allocation4], 1

</llo_original>
